<compile_context>
chip_gen: v7x
topology: tpu7x:2x2x1
jax: 0.10.0
libtpu: 0.0.40
codegen_flags: <defaults>
</compile_context>

<pallas_src>
import functools

import jax
import jax.numpy as jnp
from jax import lax
from jax.experimental import pallas as pl
from jax.experimental.pallas import tpu as pltpu


def _round_up(x, m):
    return ((x + m - 1) // m) * m


_NEG_BIG = -1e30  # additive mask bias (softmax-safe stand-in for -inf)


# --------------------------------------------------------------------------- #
# Kernel
# --------------------------------------------------------------------------- #
def _attention_kernel(key_ref, query_ref, bias_ref, wk_ref, wq_ref,
                      out_ref, scores_ref, *, use_mxu_contractions):
    # key_ref    : (TB, Dk_p)            compute dtype
    # query_ref  : (TB, S_q, Dq_p)       compute dtype   (S_q = sublane-padded S)
    # bias_ref   : (TB, S_q) f32         additive mask bias (0 or -1e30)
    # wk_ref     : (Dk_p, Dq_p)          W_k^T                     (resident)
    # wq_ref     : (Dq_p + Dk_p, Dq_p)   [W_q_ctx^T ; W_q_key^T]   (resident)
    # out_ref    : (TB, Dq_p)  f32
    # scores_ref : (TB, S_out) f32       (S_out = lane-padded S >= S_q)
    dq_p = out_ref.shape[-1]
    dk_p = key_ref.shape[-1]
    s_q = query_ref.shape[1]
    s_out = scores_ref.shape[-1]

    key = key_ref[...]
    query = query_ref[...]
    bias = bias_ref[...]

    # x = W_k(key): (TB, Dq_p) on the MXU, f32 accumulation.
    xk = jnp.dot(key, wk_ref[...], preferred_element_type=jnp.float32)
    xk_c = xk.astype(query.dtype)

    if use_mxu_contractions:
        # scores[b, s] = sum_d query[b, s, d] * xk[b, d]  (batched matvec, MXU)
        scores = lax.dot_general(
            query, xk_c,
            dimension_numbers=(((2,), (1,)), ((0,), (0,))),
            preferred_element_type=jnp.float32)                    # (TB, S_q)
    else:
        # VPU fallback: compute-dtype multiply, f32-accumulated lane reduce.
        scores = jnp.sum(query * xk_c[:, None, :], axis=2,
                         dtype=jnp.float32)                        # (TB, S_q)

    # masked softmax over S, in f32 (mask folded into an additive bias).
    scores = scores + bias
    m = jnp.max(scores, axis=1, keepdims=True)
    e = jnp.exp(scores - m)
    denom = jnp.sum(e, axis=1, keepdims=True)
    p = e * pl.reciprocal(denom, approx=True)                      # EUP reciprocal

    p_c = p.astype(query.dtype)
    if use_mxu_contractions:
        # ctx[b, d] = sum_s p[b, s] * query[b, s, d]  (batched vec-mat, MXU)
        ctx = lax.dot_general(
            p_c, query,
            dimension_numbers=(((1,), (1,)), ((0,), (0,))),
            preferred_element_type=jnp.float32)                    # (TB, Dq_p)
    else:
        ctx = jnp.sum(p_c[:, :, None] * query, axis=1,
                      dtype=jnp.float32)                           # (TB, Dq_p)

    # x = tanh(W_q(cat([ctx, key], dim=1)))  -- fused resident weight slab.
    w_ctx = wq_ref[pl.ds(0, dq_p), :]
    w_key = wq_ref[pl.ds(dq_p, dk_p), :]
    pre = (jnp.dot(ctx.astype(query.dtype), w_ctx,
                   preferred_element_type=jnp.float32)
           + jnp.dot(key, w_key, preferred_element_type=jnp.float32))
    out_ref[...] = jnp.tanh(pre)

    # Lane-dense attn_scores output: zero padded lanes, store p in [0, S_q).
    if s_out == s_q:
        scores_ref[...] = p
    else:
        scores_ref[...] = jnp.zeros_like(scores_ref)
        scores_ref[:, 0:s_q] = p


# --------------------------------------------------------------------------- #
# Per-layer weight preparation (hoisted out of the per-call path)
# --------------------------------------------------------------------------- #
def prepare_weights(W_k, W_q, D_key, D_query, *, compute_dtype=jnp.bfloat16):
    """Transpose / pad / fuse the two Linear weights once; cache per layer."""
    dq_p = _round_up(D_query, 128)
    dk_p = _round_up(D_key, 128)
    W_k32 = jnp.asarray(W_k, jnp.float32)
    W_q32 = jnp.asarray(W_q, jnp.float32)
    assert W_k32.shape == (D_query, D_key)
    assert W_q32.shape == (D_query, D_key + D_query)

    def _pad2(a, rows, cols):
        return jnp.pad(a, ((0, rows - a.shape[0]), (0, cols - a.shape[1])))

    wk_t = _pad2(W_k32.T, dk_p, dq_p).astype(compute_dtype)        # (Dk_p, Dq_p)
    wq_ctx_t = _pad2(W_q32[:, :D_query].T, dq_p, dq_p)             # (Dq_p, Dq_p)
    wq_key_t = _pad2(W_q32[:, D_query:].T, dk_p, dq_p)             # (Dk_p, Dq_p)
    wq_fused = jnp.concatenate([wq_ctx_t, wq_key_t],
                               axis=0).astype(compute_dtype)       # (Dq_p+Dk_p, Dq_p)
    return wk_t, wq_fused


def _vmem_budget():
    """(vmem_limit_bytes, tile budget, small-VMEM flag) per TPU generation."""
    try:
        cap = int(pltpu.get_tpu_info().vmem_capacity_bytes)
    except Exception:
        cap = 64 * 1024 * 1024                  # conservative (v7x-like) default
    limit = min(96 * 1024 * 1024, (cap * 3) // 4)   # 96 MiB on v5e/v6e, 48 on v7x
    budget = (limit * 5) // 6
    small_vmem = cap < 100 * 1024 * 1024        # v7x-like: 64 MiB, 2 TCs / chip
    return limit, budget, small_vmem


_MXU_CONTRACTIONS_OK = None   # resolved on first call (one-time lowering probe)


# --------------------------------------------------------------------------- #
# Wrapper (layout glue: padding, bias mask, grid / BlockSpecs, VMEM budgeting)
# --------------------------------------------------------------------------- #
def attention_layer(key, query, pad_mask, W_k, W_q, *,
                    compute_dtype=jnp.bfloat16, prepared=None):
    """key: (B, Dk), query: (B, S, Dq), pad_mask: (B, S) bool/int,
    W_k: (Dq, Dk), W_q: (Dq, Dk + Dq)  (PyTorch Linear weight layout)."""
    global _MXU_CONTRACTIONS_OK

    B, Dk = key.shape
    B2, S, Dq = query.shape
    assert B2 == B and pad_mask.shape == (B, S)
    assert W_k.shape == (Dq, Dk)
    assert W_q.shape == (Dq, Dk + Dq)

    f32 = jnp.float32
    in_bytes = jnp.dtype(compute_dtype).itemsize

    # Padded geometry: lane-dense (128) on feature dims and the scores output,
    # but only sublane-aligned on the streamed query's S dim.
    sub = 8 if in_bytes >= 4 else 16
    s_q = _round_up(S, sub)
    s_out = _round_up(S, 128)
    dq_p = _round_up(Dq, 128)
    dk_p = _round_up(Dk, 128)

    vmem_limit, vmem_budget, small_vmem = _vmem_budget()

    def _tile_bytes(tb):
        q_blk = tb * s_q * dq_p * in_bytes * 2          # double-buffered query
        k_blk = tb * dk_p * in_bytes * 2
        bias_blk = tb * s_q * 4 * 2
        out_blk = tb * dq_p * 4 * 2
        sc_blk = tb * s_out * 4 * 2
        w_res = (dk_p * dq_p + (dq_p + dk_p) * dq_p) * in_bytes * 2  # weight slabs
        tmps = tb * (3 * dq_p + 4 * s_q) * 4            # f32 xk/ctx/pre + softmax
        return q_blk + k_blk + bias_blk + out_blk + sc_blk + w_res + tmps + (2 << 20)

    b_pad0 = _round_up(B, 8)
    tb = 512                                            # keep the MXU M-dim well fed
    while tb > 8 and (_round_up(b_pad0, tb) > (b_pad0 * 5) // 4
                      or _tile_bytes(tb) > vmem_budget):
        tb //= 2
    b_pad = _round_up(B, tb)
    if small_vmem and b_pad // tb < 2 and b_pad >= 16:
        tb = max(8, tb // 2)                            # >= 2 grid steps for 2nd TC
        b_pad = _round_up(B, tb)
    grid = (b_pad // tb,)

    # ---- input glue: cast, pad, mask -> additive bias ---------------------- #
    key_p = jnp.pad(jnp.asarray(key, f32).astype(compute_dtype),
                    ((0, b_pad - B), (0, dk_p - Dk)))
    query_p = jnp.pad(jnp.asarray(query, f32).astype(compute_dtype),
                      ((0, b_pad - B), (0, s_q - S), (0, dq_p - Dq)))

    bias = jnp.where(jnp.asarray(pad_mask).astype(bool), _NEG_BIG, 0.0).astype(f32)
    bias_p = jnp.pad(bias, ((0, 0), (0, s_q - S)), constant_values=_NEG_BIG)
    bias_p = jnp.pad(bias_p, ((0, b_pad - B), (0, 0)), constant_values=0.0)

    if prepared is None:
        prepared = prepare_weights(W_k, W_q, Dk, Dq, compute_dtype=compute_dtype)
    wk_t, wq_fused = prepared
    assert wk_t.shape == (dk_p, dq_p) and wk_t.dtype == jnp.dtype(compute_dtype)
    assert wq_fused.shape == (dq_p + dk_p, dq_p)
    assert wq_fused.dtype == jnp.dtype(compute_dtype)

    def _run(use_mxu):
        kernel = functools.partial(_attention_kernel,
                                   use_mxu_contractions=use_mxu)
        return pl.pallas_call(
            kernel,
            grid=grid,
            in_specs=[
                pl.BlockSpec((tb, dk_p), lambda i: (i, 0)),
                pl.BlockSpec((tb, s_q, dq_p), lambda i: (i, 0, 0)),
                pl.BlockSpec((tb, s_q), lambda i: (i, 0)),
                pl.BlockSpec((dk_p, dq_p), lambda i: (0, 0)),            # resident
                pl.BlockSpec((dq_p + dk_p, dq_p), lambda i: (0, 0)),     # resident
            ],
            out_specs=(
                pl.BlockSpec((tb, dq_p), lambda i: (i, 0)),
                pl.BlockSpec((tb, s_out), lambda i: (i, 0)),
            ),
            out_shape=(
                jax.ShapeDtypeStruct((b_pad, dq_p), f32),
                jax.ShapeDtypeStruct((b_pad, s_out), f32),
            ),
            compiler_params=pltpu.CompilerParams(
                dimension_semantics=("parallel",),
                vmem_limit_bytes=vmem_limit,
            ),
        )(key_p, query_p, bias_p, wk_t, wq_fused)

    if _MXU_CONTRACTIONS_OK is None:
        try:
            out_p, scores_p = _run(True)
            jax.block_until_ready(out_p)
            _MXU_CONTRACTIONS_OK = True
        except Exception:
            # This jax/libtpu's Mosaic lowering rejects batched dot_general:
            # fall back to the VPU multiply + f32-accumulated reduce path.
            _MXU_CONTRACTIONS_OK = False
            out_p, scores_p = _run(False)
    else:
        out_p, scores_p = _run(_MXU_CONTRACTIONS_OK)

    return out_p[:B, :Dq], scores_p[:B, :S]


# --------------------------------------------------------------------------- #
# Pure-JAX reference mirroring the PyTorch forward.
# --------------------------------------------------------------------------- #
def attention_layer_ref(key, query, pad_mask, W_k, W_q):
    xk = key @ W_k.T
    scores = jnp.sum(query * xk[:, None, :], axis=2)
    scores = jnp.where(pad_mask.astype(bool), -jnp.inf, scores.astype(jnp.float32))
    p = jax.nn.softmax(scores, axis=1)
    ctx = jnp.sum(p[:, :, None] * query, axis=1)
    x = jnp.tanh(jnp.concatenate([ctx, key], axis=1) @ W_q.T)
    return x, p


if __name__ == "__main__":
    B, S, D_key, D_query = 4, 8, 16, 32

    root = jax.random.PRNGKey(0)
    k_key, k_query, k_mask, k_wk, k_wq = jax.random.split(root, 5)

    key = jax.random.normal(k_key, (B, D_key), dtype=jnp.float32)
    query = jax.random.normal(k_query, (B, S, D_query), dtype=jnp.float32)
    # Padding mask with a few padded positions but never a fully-masked row
    # (fully-masked rows are NaN in the PyTorch module as well).
    pad_mask = (jax.random.uniform(k_mask, (B, S)) > 0.7).at[:, 0].set(False)

    # Deterministic PyTorch-style Linear init: U(-1/sqrt(fan_in), 1/sqrt(fan_in)).
    bk = 1.0 / jnp.sqrt(jnp.float32(D_key))
    bq = 1.0 / jnp.sqrt(jnp.float32(D_key + D_query))
    W_k = jax.random.uniform(k_wk, (D_query, D_key), jnp.float32, -bk, bk)
    W_q = jax.random.uniform(k_wq, (D_query, D_key + D_query), jnp.float32, -bq, bq)

    out_ref, scores_ref = attention_layer_ref(key, query, pad_mask, W_k, W_q)

    # f32 compute path (MXU precision + approx reciprocal => ~1e-2 level).
    out32, sc32 = attention_layer(key, query, pad_mask, W_k, W_q,
                                  compute_dtype=jnp.float32)
    jax.block_until_ready((out32, sc32))
    assert out32.shape == (B, D_query) and sc32.shape == (B, S)
    assert jnp.allclose(out32, out_ref, atol=3e-2, rtol=3e-2)
    assert jnp.allclose(sc32, scores_ref, atol=3e-2, rtol=3e-2)

    # Default bf16 streaming path, with the padded weight slabs prepared once
    # (review item: hoist per-layer weight prep out of the per-call path).
    prepared = prepare_weights(W_k, W_q, D_key, D_query,
                               compute_dtype=jnp.bfloat16)
    out_bf, sc_bf = attention_layer(key, query, pad_mask, W_k, W_q,
                                    prepared=prepared)
    jax.block_until_ready((out_bf, sc_bf))
    assert out_bf.shape == (B, D_query) and sc_bf.shape == (B, S)
    assert jnp.allclose(out_bf, out_ref, atol=1e-1, rtol=1e-1)
    assert jnp.allclose(sc_bf, scores_ref, atol=1e-1, rtol=1e-1)

    print("KERNEL_OK")
</pallas_src>

<mosaic_0001>
module attributes {stable_mosaic.version = 11 : i64} {
  func.func @_attention_kernel(%arg0: i32, %arg1: memref<8x128xf32, #tpu.memory_space<vmem>>, %arg2: memref<8x8x128xf32, #tpu.memory_space<vmem>>, %arg3: memref<8x8xf32, #tpu.memory_space<vmem>>, %arg4: memref<128x128xf32, #tpu.memory_space<vmem>>, %arg5: memref<256x128xf32, #tpu.memory_space<vmem>>, %arg6: memref<8x128xf32, #tpu.memory_space<vmem>>, %arg7: memref<8x128xf32, #tpu.memory_space<vmem>>) attributes {dimension_semantics = [#tpu.dimension_semantics<parallel>], iteration_bounds = array<i64: 1>, scalar_prefetch = 0 : i64, scratch_operands = 0 : i64, tpu.core_type = #tpu.core_type<tc>, window_params = [{transform_indices = @transform_0, window_bounds = array<i64: 8, 128>}, {transform_indices = @transform_1, window_bounds = array<i64: 8, 8, 128>}, {transform_indices = @transform_2, window_bounds = array<i64: 8, 8>}, {pipeline_mode = #tpu.pipeline_mode<synchronous>, transform_indices = @transform_3, window_bounds = array<i64: 128, 128>}, {pipeline_mode = #tpu.pipeline_mode<synchronous>, transform_indices = @transform_4, window_bounds = array<i64: 256, 128>}, {transform_indices = @transform_5, window_bounds = array<i64: 8, 128>}, {transform_indices = @transform_6, window_bounds = array<i64: 8, 128>}]} {
    %c0 = arith.constant 0 : index
    %c0_0 = arith.constant 0 : index
    %0 = vector.load %arg1[%c0, %c0_0] : memref<8x128xf32, #tpu.memory_space<vmem>>, vector<8x128xf32>
    %c0_1 = arith.constant 0 : index
    %c0_2 = arith.constant 0 : index
    %c0_3 = arith.constant 0 : index
    %1 = vector.load %arg2[%c0_1, %c0_2, %c0_3] : memref<8x8x128xf32, #tpu.memory_space<vmem>>, vector<8x8x128xf32>
    %c0_4 = arith.constant 0 : index
    %c0_5 = arith.constant 0 : index
    %2 = vector.load %arg3[%c0_4, %c0_5] : memref<8x8xf32, #tpu.memory_space<vmem>>, vector<8x8xf32>
    %c0_6 = arith.constant 0 : index
    %c0_7 = arith.constant 0 : index
    %3 = vector.load %arg4[%c0_6, %c0_7] : memref<128x128xf32, #tpu.memory_space<vmem>>, vector<128x128xf32>
    %cst = arith.constant dense<0.000000e+00> : vector<8x128xf32>
    %4 = tpu.matmul %0, %3, %cst {dimension_numbers = #tpu.dot_dimension_numbers<[1], [0], [0], [1], [0, 0, 1, 1], [], []>} : vector<8x128xf32>, vector<128x128xf32>, vector<8x128xf32> -> vector<8x128xf32>
    %5 = vector.shape_cast %4 : vector<8x128xf32> to vector<8x1x128xf32>
    %6 = vector.broadcast %5 : vector<8x1x128xf32> to vector<8x8x128xf32>
    %7 = arith.mulf %1, %6 : vector<8x8x128xf32>
    %cst_8 = arith.constant dense<0.000000e+00> : vector<8x8xf32>
    %8 = vector.multi_reduction <add>, %7, %cst_8 [2] : vector<8x8x128xf32> to vector<8x8xf32>
    %9 = arith.addf %8, %2 : vector<8x8xf32>
    %cst_9 = arith.constant dense<0xFF800000> : vector<8xf32>
    %10 = vector.multi_reduction <maximumf>, %9, %cst_9 [1] : vector<8x8xf32> to vector<8xf32>
    %11 = vector.shape_cast %10 : vector<8xf32> to vector<8x1xf32>
    %12 = vector.broadcast %11 : vector<8x1xf32> to vector<8x8xf32>
    %13 = arith.subf %9, %12 : vector<8x8xf32>
    %14 = math.exp %13 : vector<8x8xf32>
    %cst_10 = arith.constant dense<0.000000e+00> : vector<8xf32>
    %15 = vector.multi_reduction <add>, %14, %cst_10 [1] : vector<8x8xf32> to vector<8xf32>
    %16 = vector.shape_cast %15 : vector<8xf32> to vector<8x1xf32>
    %17 = tpu.reciprocal %16 {approx = true} : vector<8x1xf32> -> vector<8x1xf32>
    %18 = vector.broadcast %17 : vector<8x1xf32> to vector<8x8xf32>
    %19 = arith.mulf %14, %18 : vector<8x8xf32>
    %20 = vector.shape_cast %19 : vector<8x8xf32> to vector<8x8x1xf32>
    %21 = vector.broadcast %20 : vector<8x8x1xf32> to vector<8x8x128xf32>
    %22 = arith.mulf %21, %1 : vector<8x8x128xf32>
    %cst_11 = arith.constant dense<0.000000e+00> : vector<8x128xf32>
    %23 = vector.multi_reduction <add>, %22, %cst_11 [1] : vector<8x8x128xf32> to vector<8x128xf32>
    %c0_12 = arith.constant 0 : index
    %c0_13 = arith.constant 0 : index
    %24 = vector.load %arg5[%c0_12, %c0_13] : memref<256x128xf32, #tpu.memory_space<vmem>>, vector<128x128xf32>
    %c128 = arith.constant 128 : index
    %c0_14 = arith.constant 0 : index
    %25 = vector.load %arg5[%c128, %c0_14] : memref<256x128xf32, #tpu.memory_space<vmem>>, vector<128x128xf32>
    %cst_15 = arith.constant dense<0.000000e+00> : vector<8x128xf32>
    %26 = tpu.matmul %23, %24, %cst_15 {dimension_numbers = #tpu.dot_dimension_numbers<[1], [0], [0], [1], [0, 0, 1, 1], [], []>} : vector<8x128xf32>, vector<128x128xf32>, vector<8x128xf32> -> vector<8x128xf32>
    %cst_16 = arith.constant dense<0.000000e+00> : vector<8x128xf32>
    %27 = tpu.matmul %0, %25, %cst_16 {dimension_numbers = #tpu.dot_dimension_numbers<[1], [0], [0], [1], [0, 0, 1, 1], [], []>} : vector<8x128xf32>, vector<128x128xf32>, vector<8x128xf32> -> vector<8x128xf32>
    %28 = arith.addf %26, %27 : vector<8x128xf32>
    %29 = math.tanh %28 : vector<8x128xf32>
    %c0_17 = arith.constant 0 : index
    %c0_18 = arith.constant 0 : index
    %30 = vector.load %arg6[%c0_17, %c0_18] : memref<8x128xf32, #tpu.memory_space<vmem>>, vector<8x128xf32>
    tpu.vector_store %arg6[%c0_17, %c0_18], %29 {strides = array<i32>} : memref<8x128xf32, #tpu.memory_space<vmem>>, vector<8x128xf32>,
    %cst_19 = arith.constant 0.000000e+00 : f32
    %31 = vector.broadcast %cst_19 : f32 to vector<8x128xf32>
    %c0_20 = arith.constant 0 : index
    %c0_21 = arith.constant 0 : index
    %32 = vector.load %arg7[%c0_20, %c0_21] : memref<8x128xf32, #tpu.memory_space<vmem>>, vector<8x128xf32>
    tpu.vector_store %arg7[%c0_20, %c0_21], %31 {strides = array<i32>} : memref<8x128xf32, #tpu.memory_space<vmem>>, vector<8x128xf32>,
    %c0_22 = arith.constant 0 : index
    %c0_23 = arith.constant 0 : index
    %33 = vector.load %arg7[%c0_22, %c0_23] : memref<8x128xf32, #tpu.memory_space<vmem>>, vector<8x8xf32>
    tpu.vector_store %arg7[%c0_22, %c0_23], %19 {strides = array<i32>} : memref<8x128xf32, #tpu.memory_space<vmem>>, vector<8x8xf32>,
    return
  }
  func.func @transform_0(%arg0: i32) -> (i32, i32) {
    %c0_i32 = arith.constant 0 : i32
    %c0_i32_0 = arith.constant 0 : i32
    return %arg0, %c0_i32 : i32, i32
  }
  func.func @transform_1(%arg0: i32) -> (i32, i32, i32) {
    %c0_i32 = arith.constant 0 : i32
    %c0_i32_0 = arith.constant 0 : i32
    %c0_i32_1 = arith.constant 0 : i32
    return %arg0, %c0_i32, %c0_i32_0 : i32, i32, i32
  }
  func.func @transform_2(%arg0: i32) -> (i32, i32) {
    %c0_i32 = arith.constant 0 : i32
    %c0_i32_0 = arith.constant 0 : i32
    return %arg0, %c0_i32 : i32, i32
  }
  func.func @transform_3(%arg0: i32) -> (i32, i32) {
    %c0_i32 = arith.constant 0 : i32
    %c0_i32_0 = arith.constant 0 : i32
    %c0_i32_1 = arith.constant 0 : i32
    return %c0_i32, %c0_i32_0 : i32, i32
  }
  func.func @transform_4(%arg0: i32) -> (i32, i32) {
    %c0_i32 = arith.constant 0 : i32
    %c0_i32_0 = arith.constant 0 : i32
    %c0_i32_1 = arith.constant 0 : i32
    return %c0_i32, %c0_i32_0 : i32, i32
  }
  func.func @transform_5(%arg0: i32) -> (i32, i32) {
    %c0_i32 = arith.constant 0 : i32
    %c0_i32_0 = arith.constant 0 : i32
    return %arg0, %c0_i32 : i32, i32
  }
  func.func @transform_6(%arg0: i32) -> (i32, i32) {
    %c0_i32 = arith.constant 0 : i32
    %c0_i32_0 = arith.constant 0 : i32
    return %arg0, %c0_i32 : i32, i32
  }
}

</mosaic_0001>

<llo_original>
// kernel: tpu_custom_call.1
$region0: #{tpu_custom_call.1}
  #allocation0 [shape = 'u32[]', space=smem, size = 0x4, offset = 0x4, fixed_abs, tag = 'smem constant byte address 0x4 - core index']
  #allocation1 [shape = 'u32[144,128]{1,0:T(1,128)}', space=vmem, size = 0x12000, scoped, tag = 'internal scratch']
  %s0 = inlined_call_operand.hbm [shape: f32[8,128], index: 0, kind: input, shape index: {}]
  %s1 = inlined_call_operand.hbm [shape: f32[8,8,128], index: 1, kind: input, shape index: {}]
  %s2 = inlined_call_operand.hbm [shape: f32[8,8], index: 2, kind: input, shape index: {}]
  %s3 = inlined_call_operand.hbm [shape: f32[128,128], index: 3, kind: input, shape index: {}]
  %s4 = inlined_call_operand.hbm [shape: f32[256,128], index: 4, kind: input, shape index: {}]
  %s5 = inlined_call_operand.hbm [shape: f32[8,128], index: 5, kind: output, shape index: {0}]
  %s6 = inlined_call_operand.hbm [shape: f32[8,128], index: 6, kind: output, shape index: {1}]
  %7 = xla_tuple %s5, %s6
  %s8 = sld [smem:[#allocation0]]
  $region58: #{tpu_custom_call.1} parent=0
    _
  %s10 = ssub.s32 1, %s8
  %s11 = scalar_select 0, %s10, %s8
  $region1: #{tpu_custom_call.1} parent=0
    #allocation2 [shape = 'u8[4096]{0}', space=vmem, size = 0x1000, scoped, tag = 'input window, operand 0, single buffered']
    #allocation3 [shape = 's32[1]{0}', space=sflag, size = 0x4, scoped, tag = 'scoped memory for tpu_custom_call.1']
    #allocation4 [shape = 's32[1]{0}', space=sflag, size = 0x4, scoped, tag = 'scoped memory for tpu_custom_call.1']
    #allocation5 [shape = 'u8[32768]{0}', space=vmem, size = 0x8000, scoped, tag = 'input window, operand 1, single buffered']
    #allocation6 [shape = 's32[1]{0}', space=sflag, size = 0x4, scoped, tag = 'scoped memory for tpu_custom_call.1']
    #allocation7 [shape = 'u8[4096]{0}', space=vmem, size = 0x1000, scoped, tag = 'input window, operand 2, single buffered']
    #allocation8 [shape = 'u8[65536]{0}', space=vmem, size = 0x10000, scoped, tag = 'input window, operand 3, single buffered']
    #allocation9 [shape = 's32[1]{0}', space=sflag, size = 0x4, scoped, tag = 'scoped memory for tpu_custom_call.1']
    #allocation10 [shape = 'u8[131072]{0}', space=vmem, size = 0x20000, scoped, tag = 'input window, operand 4, single buffered']
    #allocation11 [shape = 'u8[4096]{0}', space=vmem, size = 0x1000, scoped, tag = 'output window, operand 0, single buffered']
    #allocation12 [shape = 'u8[4096]{0}', space=vmem, size = 0x1000, scoped, tag = 'output window, operand 1, single buffered']
    #allocation13 [shape = 's32[1]{0}', space=sflag, size = 0x4, scoped, tag = 'scoped memory for tpu_custom_call.1']
    %12 = vsyncpa [#allocation3], 0
    %13 = vsyncpa [#allocation6], 0
    %14 = vsyncpa [#allocation9], 0
    %15 = vsyncpa [#allocation4], 0
    %16 = vsyncpa [#allocation13], 0
    // Predicated region
    $region2: #{tpu_custom_call.1} parent=1 // pred_check
      _
    $region3: #{tpu_custom_call.1} parent=1 // pred_check_branch
      %18 = sbr.rel (0) target = $region5
    $region4: #{tpu_custom_call.1} parent=1 // pred_region
      %s20 = ssub.s32 128, 128
      %21 = vsyncadd [#allocation3], %s20
      %s23 = sshll.u32 [#allocation2], 4
      %s24 = int_to_ptr.vmem [resolvable:$true] %s23
      %26 = dma.hbm_to_vmem [thread:$0]  %s0, 128, %s24, [#allocation3]
    $region5: #{tpu_custom_call.1} parent=1 // pred_fallthru
      _
    // Predicated region
    $region6: #{tpu_custom_call.1} parent=1 // pred_check
      _
    $region7: #{tpu_custom_call.1} parent=1 // pred_check_branch
      %28 = sbr.rel (0) target = $region9
    $region8: #{tpu_custom_call.1} parent=1 // pred_region
      %s30 = ssub.s32 1024, 1024
      %31 = vsyncadd [#allocation6], %s30
      %s32 = sshll.u32 [#allocation5], 4
      %s33 = int_to_ptr.vmem [resolvable:$true] %s32
      %38 = dma.hbm_to_vmem [thread:$0]  %s1, 1024, %s33, [#allocation6], 128, 128, 8
    $region9: #{tpu_custom_call.1} parent=1 // pred_fallthru
      _
    // Predicated region
    $region10: #{tpu_custom_call.1} parent=1 // pred_check
      _
    $region11: #{tpu_custom_call.1} parent=1 // pred_check_branch
      %40 = sbr.rel (0) target = $region13
    $region12: #{tpu_custom_call.1} parent=1 // pred_region
      %s42 = ssub.s32 128, 128
      %43 = vsyncadd [#allocation6], %s42
      %s45 = sshll.u32 [#allocation7], 4
      %s46 = int_to_ptr.vmem [resolvable:$true] %s45
      %48 = dma.hbm_to_vmem [thread:$0]  %s2, 128, %s46, [#allocation6]
    $region13: #{tpu_custom_call.1} parent=1 // pred_fallthru
      _
    // Predicated region
    $region14: #{tpu_custom_call.1} parent=1 // pred_check
      _
    $region15: #{tpu_custom_call.1} parent=1 // pred_check_branch
      %50 = sbr.rel (0) target = $region17
    $region16: #{tpu_custom_call.1} parent=1 // pred_region
      %s52 = ssub.s32 2048, 2048
      %53 = vsyncadd [#allocation9], %s52
      %s54 = sshll.u32 [#allocation8], 4
      %s55 = int_to_ptr.vmem [resolvable:$true] %s54
      %60 = dma.hbm_to_vmem [thread:$0]  %s3, 2048, %s55, [#allocation9], 128, 128, 8
    $region17: #{tpu_custom_call.1} parent=1 // pred_fallthru
      _
    // Predicated region
    $region18: #{tpu_custom_call.1} parent=1 // pred_check
      _
    $region19: #{tpu_custom_call.1} parent=1 // pred_check_branch
      %62 = sbr.rel (0) target = $region21
    $region20: #{tpu_custom_call.1} parent=1 // pred_region
      %s64 = ssub.s32 4096, 4096
      %65 = vsyncadd [#allocation9], %s64
      %s66 = sshll.u32 [#allocation10], 4
      %s67 = int_to_ptr.vmem [resolvable:$true] %s66
      %72 = dma.hbm_to_vmem [thread:$0]  %s4, 4096, %s67, [#allocation9], 128, 128, 8
    $region21: #{tpu_custom_call.1} parent=1 // pred_fallthru
      _
    // Predicated region
    $region22: #{tpu_custom_call.1} parent=1 // pred_check
      _
    $region23: #{tpu_custom_call.1} parent=1 // pred_check_branch
      %74 = sbr.rel (0) target = $region25
    $region24: #{tpu_custom_call.1} parent=1 // pred_region
      %75 = dma.done [#allocation3], 128
    $region25: #{tpu_custom_call.1} parent=1 // pred_fallthru
      _
    // Predicated region
    $region26: #{tpu_custom_call.1} parent=1 // pred_check
      _
    $region27: #{tpu_custom_call.1} parent=1 // pred_check_branch
      %77 = sbr.rel (0) target = $region29
    $region28: #{tpu_custom_call.1} parent=1 // pred_region
      %78 = dma.done [#allocation6], 1024
    $region29: #{tpu_custom_call.1} parent=1 // pred_fallthru
      _
    // Predicated region
    $region30: #{tpu_custom_call.1} parent=1 // pred_check
      _
    $region31: #{tpu_custom_call.1} parent=1 // pred_check_branch
      %80 = sbr.rel (0) target = $region33
    $region32: #{tpu_custom_call.1} parent=1 // pred_region
      %81 = dma.done [#allocation6], 128
    $region33: #{tpu_custom_call.1} parent=1 // pred_fallthru
      _
    // Predicated region
    $region34: #{tpu_custom_call.1} parent=1 // pred_check
      _
    $region35: #{tpu_custom_call.1} parent=1 // pred_check_branch
      %83 = sbr.rel (0) target = $region37
    $region36: #{tpu_custom_call.1} parent=1 // pred_region
      %84 = dma.done [#allocation9], 2048
    $region37: #{tpu_custom_call.1} parent=1 // pred_fallthru
      _
    // Predicated region
    $region38: #{tpu_custom_call.1} parent=1 // pred_check
      _
    $region39: #{tpu_custom_call.1} parent=1 // pred_check_branch
      %86 = sbr.rel (0) target = $region41
    $region40: #{tpu_custom_call.1} parent=1 // pred_region
      %87 = dma.done [#allocation9], 4096
    $region41: #{tpu_custom_call.1} parent=1 // pred_fallthru
      _
    %v88 = vld [vmem:[#allocation2] sm:$0xff]
    %v89 = vld [vmem:[#allocation5] sm:$0xff]
    %v90 = vld [vmem:[#allocation5 + $0x8] sm:$0xff]
    %v91 = vld [vmem:[#allocation5 + $0x10] sm:$0xff]
    %v92 = vld [vmem:[#allocation5 + $0x18] sm:$0xff]
    %v93 = vld [vmem:[#allocation5 + $0x20] sm:$0xff]
    %v94 = vld [vmem:[#allocation5 + $0x28] sm:$0xff]
    %v95 = vld [vmem:[#allocation5 + $0x30] sm:$0xff]
    %v96 = vld [vmem:[#allocation5 + $0x38] sm:$0xff]
    %v97 = vld [vmem:[#allocation7] sm:$0xff]
    %v98 = vld [vmem:[#allocation8] sm:$0xff]
    %v99 = vld [vmem:[#allocation8 + $0x8] sm:$0xff]
    %v100 = vld [vmem:[#allocation8 + $0x10] sm:$0xff]
    %v101 = vld [vmem:[#allocation8 + $0x18] sm:$0xff]
    %v102 = vld [vmem:[#allocation8 + $0x20] sm:$0xff]
    %v103 = vld [vmem:[#allocation8 + $0x28] sm:$0xff]
    %v104 = vld [vmem:[#allocation8 + $0x30] sm:$0xff]
    %v105 = vld [vmem:[#allocation8 + $0x38] sm:$0xff]
    %v106 = vld [vmem:[#allocation8 + $0x40] sm:$0xff]
    %v107 = vld [vmem:[#allocation8 + $0x48] sm:$0xff]
    %v108 = vld [vmem:[#allocation8 + $0x50] sm:$0xff]
    %v109 = vld [vmem:[#allocation8 + $0x58] sm:$0xff]
    %v110 = vld [vmem:[#allocation8 + $0x60] sm:$0xff]
    %v111 = vld [vmem:[#allocation8 + $0x68] sm:$0xff]
    %v112 = vld [vmem:[#allocation8 + $0x70] sm:$0xff]
    %v113 = vld [vmem:[#allocation8 + $0x78] sm:$0xff]
    %114 = vmatprep.subr.mxu0 0.0
    %115 = vmatpush1.msra.mxu0 %v98
    %116 = vmatprep.subr.mxu0 0.0
    %117 = vmatpush1.msra.mxu0 %v99
    %118 = vmatprep.subr.mxu0 0.0
    %119 = vmatpush1.msra.mxu0 %v100
    %120 = vmatprep.subr.mxu0 0.0
    %121 = vmatpush1.msra.mxu0 %v101
    %122 = vmatprep.subr.mxu0 0.0
    %123 = vmatpush1.msra.mxu0 %v102
    %124 = vmatprep.subr.mxu0 0.0
    %125 = vmatpush1.msra.mxu0 %v103
    %126 = vmatprep.subr.mxu0 0.0
    %127 = vmatpush1.msra.mxu0 %v104
    %128 = vmatprep.subr.mxu0 0.0
    %129 = vmatpush1.msra.mxu0 %v105
    %130 = vmatprep.subr.mxu0 0.0
    %131 = vmatpush1.msra.mxu0 %v106
    %132 = vmatprep.subr.mxu0 0.0
    %133 = vmatpush1.msra.mxu0 %v107
    %134 = vmatprep.subr.mxu0 0.0
    %135 = vmatpush1.msra.mxu0 %v108
    %136 = vmatprep.subr.mxu0 0.0
    %137 = vmatpush1.msra.mxu0 %v109
    %138 = vmatprep.subr.mxu0 0.0
    %139 = vmatpush1.msra.mxu0 %v110
    %140 = vmatprep.subr.mxu0 0.0
    %141 = vmatpush1.msra.mxu0 %v111
    %142 = vmatprep.subr.mxu0 0.0
    %143 = vmatpush1.msra.mxu0 %v112
    %144 = vmatprep.subr.mxu0 0.0
    %145 = vmatpush1.msra.mxu0 %v113
    %146 = vmatprep.subr.mxu0 0.0
    %147 = vmatpush1.msra.mxu0 0.0
    %148 = vmatprep.subr.mxu0 0.0
    %149 = vmatpush1.msra.mxu0 0.0
    %150 = vmatprep.subr.mxu0 0.0
    %151 = vmatpush1.msra.mxu0 0.0
    %152 = vmatprep.subr.mxu0 0.0
    %153 = vmatpush1.msra.mxu0 0.0
    %154 = vmatprep.subr.mxu0 0.0
    %155 = vmatpush1.msra.mxu0 0.0
    %156 = vmatprep.subr.mxu0 0.0
    %157 = vmatpush1.msra.mxu0 0.0
    %158 = vmatprep.subr.mxu0 0.0
    %159 = vmatpush1.msra.mxu0 0.0
    %160 = vmatprep.subr.mxu0 0.0
    %161 = vmatpush1.msra.mxu0 0.0
    %162 = vmatprep.subr.mxu0 0.0
    %163 = vmatpush1.msra.mxu0 0.0
    %164 = vmatprep.subr.mxu0 0.0
    %165 = vmatpush1.msra.mxu0 0.0
    %166 = vmatprep.subr.mxu0 0.0
    %167 = vmatpush1.msra.mxu0 0.0
    %168 = vmatprep.subr.mxu0 0.0
    %169 = vmatpush1.msra.mxu0 0.0
    %170 = vmatprep.subr.mxu0 0.0
    %171 = vmatpush1.msra.mxu0 0.0
    %172 = vmatprep.subr.mxu0 0.0
    %173 = vmatpush1.msra.mxu0 0.0
    %174 = vmatprep.subr.mxu0 0.0
    %175 = vmatpush1.msra.mxu0 0.0
    %176 = vmatprep.subr.mxu0 0.0
    %177 = vmatpush1.msra.mxu0 0.0
    %178 = vmatprep.mubr.f32.mxu0 0.0
    %179 = vmatmul.mubr.f32.gmra.mrb[0].mxu0 %v88
    %v180 = vpop.f32.mrb[0].mxu0
    %v181 = vadd.f32 0.0, %v180
    %v182 = vpop.f32.mrb[0].mxu0
    %183 = vdwg.mxu0
    %v185 = vcombine.high %v181, %v181
    %v187 = vunpack.c.l.s4 1966171168
    %v188 = vunpack.c.0.s8 %v187
    %v189 = vlaneseq
    %v190 = vshrl.u32 %v189, 7
    %v191 = vsub.s32 %v188, %v190
    %v192 = vrot.slane %v181, %v191
    %v194 = vunpack.c.l.s4 1966171168
    %v195 = vunpack.c.0.s8 %v194
    %v196 = vlaneseq
    %v197 = vshrl.u32 %v196, 7
    %v198 = vsub.s32 %v195, %v197
    %v199 = vrot.slane %v185, %v198
    %v200 = vcombine.high %v192, %v192
    %v201 = vcombine.high %v199, %v199
    %v203 = vunpack.c.l.s4 1966171168
    %v204 = vunpack.c.0.s8 %v203
    %v205 = vlaneseq
    %v206 = vshrl.u32 %v205, 7
    %v207 = vsub.s32 %v204, %v206
    %v208 = vrot.slane %v192, %v207
    %v210 = vunpack.c.l.s4 1966171168
    %v211 = vunpack.c.0.s8 %v210
    %v212 = vlaneseq
    %v213 = vshrl.u32 %v212, 7
    %v214 = vsub.s32 %v211, %v213
    %v215 = vrot.slane %v199, %v214
    %v217 = vunpack.c.l.s4 1966171168
    %v218 = vunpack.c.0.s8 %v217
    %v219 = vlaneseq
    %v220 = vshrl.u32 %v219, 7
    %v221 = vsub.s32 %v218, %v220
    %v222 = vrot.slane %v200, %v221
    %v224 = vunpack.c.l.s4 1966171168
    %v225 = vunpack.c.0.s8 %v224
    %v226 = vlaneseq
    %v227 = vshrl.u32 %v226, 7
    %v228 = vsub.s32 %v225, %v227
    %v229 = vrot.slane %v201, %v228
    %v230 = vcombine.high %v208, %v208
    %v231 = vcombine.high %v215, %v215
    %v232 = vcombine.high %v222, %v222
    %v233 = vcombine.high %v229, %v229
    %v234 = vlaneseq
    %v235 = vshrl.u32 %v234, 7
    %v236 = vsub.s32 0, %v235
    %v237 = vrot.slane %v208, %v236
    %v238 = vlaneseq
    %v239 = vshrl.u32 %v238, 7
    %v240 = vsub.s32 0, %v239
    %v241 = vrot.slane %v222, %v240
    %v242 = vlaneseq
    %v243 = vshrl.u32 %v242, 7
    %v244 = vsub.s32 0, %v243
    %v245 = vrot.slane %v230, %v244
    %v246 = vlaneseq
    %v247 = vshrl.u32 %v246, 7
    %v248 = vsub.s32 0, %v247
    %v249 = vrot.slane %v232, %v248
    %v250 = vlaneseq
    %v251 = vshrl.u32 %v250, 7
    %v252 = vsub.s32 0, %v251
    %v253 = vrot.slane %v215, %v252
    %v254 = vlaneseq
    %v255 = vshrl.u32 %v254, 7
    %v256 = vsub.s32 0, %v255
    %v257 = vrot.slane %v229, %v256
    %v258 = vlaneseq
    %v259 = vshrl.u32 %v258, 7
    %v260 = vsub.s32 0, %v259
    %v261 = vrot.slane %v231, %v260
    %v262 = vlaneseq
    %v263 = vshrl.u32 %v262, 7
    %v264 = vsub.s32 0, %v263
    %v265 = vrot.slane %v233, %v264
    %v274 = vmul.f32 %v89, %v237
    %v275 = vmul.f32 %v90, %v241
    %v276 = vmul.f32 %v91, %v245
    %v277 = vmul.f32 %v92, %v249
    %v278 = vmul.f32 %v93, %v253
    %v279 = vmul.f32 %v94, %v257
    %v280 = vmul.f32 %v95, %v261
    %v281 = vmul.f32 %v96, %v265
    %282 = vadd.xlane.f32.xlu0 %v274
    %v283 = vpop.xlane.xlu0 %282
    %284 = vadd.xlane.f32.xlu0 %v275
    %v285 = vpop.xlane.xlu0 %284
    %286 = vadd.xlane.f32.xlu0 %v276
    %v287 = vpop.xlane.xlu0 %286
    %288 = vadd.xlane.f32.xlu0 %v277
    %v289 = vpop.xlane.xlu0 %288
    %290 = vadd.xlane.f32.xlu0 %v278
    %v291 = vpop.xlane.xlu0 %290
    %292 = vadd.xlane.f32.xlu0 %v279
    %v293 = vpop.xlane.xlu0 %292
    %294 = vadd.xlane.f32.xlu0 %v280
    %v295 = vpop.xlane.xlu0 %294
    %296 = vadd.xlane.f32.xlu0 %v281
    %v297 = vpop.xlane.xlu0 %296
    %v299 = vlaneseq
    %v300 = vshrl.u32 %v299, 7
    %v301 = vsub.s32 0, %v300
    %v302 = vrot.slane %v97, %v301
    %304 = vbcast.lane.b32.xlu0 %v302, 256
    %v305 = vpop.permute.xlu0 %304
    %v306 = vlaneseq
    %v307 = vshrl.u32 %v306, 7
    %v308 = vsub.s32 1, %v307
    %v309 = vrot.slane %v97, %v308
    %311 = vbcast.lane.b32.xlu0 %v309, 256
    %v312 = vpop.permute.xlu0 %311
    %v313 = vlaneseq
    %v314 = vshrl.u32 %v313, 7
    %v315 = vsub.s32 2, %v314
    %v316 = vrot.slane %v97, %v315
    %318 = vbcast.lane.b32.xlu0 %v316, 256
    %v319 = vpop.permute.xlu0 %318
    %v320 = vlaneseq
    %v321 = vshrl.u32 %v320, 7
    %v322 = vsub.s32 3, %v321
    %v323 = vrot.slane %v97, %v322
    %325 = vbcast.lane.b32.xlu0 %v323, 256
    %v326 = vpop.permute.xlu0 %325
    %v327 = vlaneseq
    %v328 = vshrl.u32 %v327, 7
    %v329 = vsub.s32 4, %v328
    %v330 = vrot.slane %v97, %v329
    %332 = vbcast.lane.b32.xlu0 %v330, 256
    %v333 = vpop.permute.xlu0 %332
    %v334 = vlaneseq
    %v335 = vshrl.u32 %v334, 7
    %v336 = vsub.s32 5, %v335
    %v337 = vrot.slane %v97, %v336
    %339 = vbcast.lane.b32.xlu0 %v337, 256
    %v340 = vpop.permute.xlu0 %339
    %v341 = vlaneseq
    %v342 = vshrl.u32 %v341, 7
    %v343 = vsub.s32 6, %v342
    %v344 = vrot.slane %v97, %v343
    %346 = vbcast.lane.b32.xlu0 %v344, 256
    %v347 = vpop.permute.xlu0 %346
    %v348 = vlaneseq
    %v349 = vshrl.u32 %v348, 7
    %v350 = vsub.s32 7, %v349
    %v351 = vrot.slane %v97, %v350
    %353 = vbcast.lane.b32.xlu0 %v351, 256
    %v354 = vpop.permute.xlu0 %353
    %v363 = vadd.f32 %v283, %v305
    %v364 = vadd.f32 %v285, %v312
    %v365 = vadd.f32 %v287, %v319
    %v366 = vadd.f32 %v289, %v326
    %v367 = vadd.f32 %v291, %v333
    %v368 = vadd.f32 %v293, %v340
    %v369 = vadd.f32 %v295, %v347
    %v370 = vadd.f32 %v297, %v354
    %379 = vset.pattern.permute.xlu0 0
    %380 = vperm.xlu0 %379, %v363
    %v381 = vpop.permute.xlu0 %380
    %382 = vset.pattern.permute.xlu0 0
    %383 = vperm.xlu0 %382, %v364
    %v384 = vpop.permute.xlu0 %383
    %385 = vset.pattern.permute.xlu0 0
    %386 = vperm.xlu0 %385, %v365
    %v387 = vpop.permute.xlu0 %386
    %388 = vset.pattern.permute.xlu0 0
    %389 = vperm.xlu0 %388, %v366
    %v390 = vpop.permute.xlu0 %389
    %391 = vset.pattern.permute.xlu0 0
    %392 = vperm.xlu0 %391, %v367
    %v393 = vpop.permute.xlu0 %392
    %394 = vset.pattern.permute.xlu0 0
    %395 = vperm.xlu0 %394, %v368
    %v396 = vpop.permute.xlu0 %395
    %397 = vset.pattern.permute.xlu0 0
    %398 = vperm.xlu0 %397, %v369
    %v399 = vpop.permute.xlu0 %398
    %400 = vset.pattern.permute.xlu0 0
    %401 = vperm.xlu0 %400, %v370
    %v402 = vpop.permute.xlu0 %401
    %v403 = vlaneseq
    %v404 = vand.u32 %v403, 127
    %v405 = vlaneseq
    %v406 = vshrl.u32 %v405, 7
    %v407 = vsub.s32 %v404, %v406
    %v408 = vrot.slane %v381, %v407
    %v409 = vlaneseq
    %v410 = vshrl.u32 %v409, 7
    %v411 = vsub.s32 %v404, %v410
    %v412 = vrot.slane %v384, %v411
    %v413 = vlaneseq
    %v414 = vshrl.u32 %v413, 7
    %v415 = vsub.s32 %v404, %v414
    %v416 = vrot.slane %v387, %v415
    %v417 = vlaneseq
    %v418 = vshrl.u32 %v417, 7
    %v419 = vsub.s32 %v404, %v418
    %v420 = vrot.slane %v390, %v419
    %v421 = vlaneseq
    %v422 = vshrl.u32 %v421, 7
    %v423 = vsub.s32 %v404, %v422
    %v424 = vrot.slane %v393, %v423
    %v425 = vlaneseq
    %v426 = vshrl.u32 %v425, 7
    %v427 = vsub.s32 %v404, %v426
    %v428 = vrot.slane %v396, %v427
    %v429 = vlaneseq
    %v430 = vshrl.u32 %v429, 7
    %v431 = vsub.s32 %v404, %v430
    %v432 = vrot.slane %v399, %v431
    %v433 = vlaneseq
    %v434 = vshrl.u32 %v433, 7
    %v435 = vsub.s32 %v404, %v434
    %v436 = vrot.slane %v402, %v435
    %vm437 = vcmask 1041409
    %v438 = vsel %vm437, %v412, %v408
    %vm439 = vcmask 1042434
    %v440 = vsel %vm439, %v416, %v438
    %vm441 = vcmask 1043459
    %v442 = vsel %vm441, %v420, %v440
    %vm443 = vcmask 1044484
    %v444 = vsel %vm443, %v424, %v442
    %vm445 = vcmask 1045509
    %v446 = vsel %vm445, %v428, %v444
    %vm447 = vcmask 1046534
    %v448 = vsel %vm447, %v432, %v446
    %vm449 = vcmask 1047559
    %v450 = vsel %vm449, %v436, %v448
    %vm452 = vcmask 64512
    %v453 = vsel %vm452, %v450, -inf
    %454 = vmax.xlane.f32.xlu0 %v453
    %v455 = vpop.xlane.xlu0 %454
    %v457 = vlaneseq
    %v458 = vshrl.u32 %v457, 7
    %v459 = vsub.s32 0, %v458
    %v460 = vrot.slane %v455, %v459
    %v461 = vlaneseq
    %v462 = vshrl.u32 %v461, 7
    %v463 = vsub.s32 1, %v462
    %v464 = vrot.slane %v455, %v463
    %v465 = vlaneseq
    %v466 = vshrl.u32 %v465, 7
    %v467 = vsub.s32 2, %v466
    %v468 = vrot.slane %v455, %v467
    %v469 = vlaneseq
    %v470 = vshrl.u32 %v469, 7
    %v471 = vsub.s32 3, %v470
    %v472 = vrot.slane %v455, %v471
    %v473 = vlaneseq
    %v474 = vshrl.u32 %v473, 7
    %v475 = vsub.s32 4, %v474
    %v476 = vrot.slane %v455, %v475
    %v477 = vlaneseq
    %v478 = vshrl.u32 %v477, 7
    %v479 = vsub.s32 5, %v478
    %v480 = vrot.slane %v455, %v479
    %v481 = vlaneseq
    %v482 = vshrl.u32 %v481, 7
    %v483 = vsub.s32 6, %v482
    %v484 = vrot.slane %v455, %v483
    %v485 = vlaneseq
    %v486 = vshrl.u32 %v485, 7
    %v487 = vsub.s32 7, %v486
    %v488 = vrot.slane %v455, %v487
    %v497 = vsub.f32 %v363, %v460
    %v498 = vsub.f32 %v364, %v464
    %v499 = vsub.f32 %v365, %v468
    %v500 = vsub.f32 %v366, %v472
    %v501 = vsub.f32 %v367, %v476
    %v502 = vsub.f32 %v368, %v480
    %v503 = vsub.f32 %v369, %v484
    %v504 = vsub.f32 %v370, %v488
    %v505 = vmul.f32 %v497, 1.442695
    %v506 = vpow.pop %v505
    %v507 = vmul.f32 %v498, 1.442695
    %v508 = vpow.pop %v507
    %v509 = vmul.f32 %v499, 1.442695
    %v510 = vpow.pop %v509
    %v511 = vmul.f32 %v500, 1.442695
    %v512 = vpow.pop %v511
    %v513 = vmul.f32 %v501, 1.442695
    %v514 = vpow.pop %v513
    %v515 = vmul.f32 %v502, 1.442695
    %v516 = vpow.pop %v515
    %v517 = vmul.f32 %v503, 1.442695
    %v518 = vpow.pop %v517
    %v519 = vmul.f32 %v504, 1.442695
    %v520 = vpow.pop %v519
    %529 = vset.pattern.permute.xlu0 0
    %530 = vperm.xlu0 %529, %v506
    %v531 = vpop.permute.xlu0 %530
    %532 = vset.pattern.permute.xlu0 0
    %533 = vperm.xlu0 %532, %v508
    %v534 = vpop.permute.xlu0 %533
    %535 = vset.pattern.permute.xlu0 0
    %536 = vperm.xlu0 %535, %v510
    %v537 = vpop.permute.xlu0 %536
    %538 = vset.pattern.permute.xlu0 0
    %539 = vperm.xlu0 %538, %v512
    %v540 = vpop.permute.xlu0 %539
    %541 = vset.pattern.permute.xlu0 0
    %542 = vperm.xlu0 %541, %v514
    %v543 = vpop.permute.xlu0 %542
    %544 = vset.pattern.permute.xlu0 0
    %545 = vperm.xlu0 %544, %v516
    %v546 = vpop.permute.xlu0 %545
    %547 = vset.pattern.permute.xlu0 0
    %548 = vperm.xlu0 %547, %v518
    %v549 = vpop.permute.xlu0 %548
    %550 = vset.pattern.permute.xlu0 0
    %551 = vperm.xlu0 %550, %v520
    %v552 = vpop.permute.xlu0 %551
    %v553 = vlaneseq
    %v554 = vshrl.u32 %v553, 7
    %v555 = vsub.s32 %v404, %v554
    %v556 = vrot.slane %v531, %v555
    %v557 = vlaneseq
    %v558 = vshrl.u32 %v557, 7
    %v559 = vsub.s32 %v404, %v558
    %v560 = vrot.slane %v534, %v559
    %v561 = vlaneseq
    %v562 = vshrl.u32 %v561, 7
    %v563 = vsub.s32 %v404, %v562
    %v564 = vrot.slane %v537, %v563
    %v565 = vlaneseq
    %v566 = vshrl.u32 %v565, 7
    %v567 = vsub.s32 %v404, %v566
    %v568 = vrot.slane %v540, %v567
    %v569 = vlaneseq
    %v570 = vshrl.u32 %v569, 7
    %v571 = vsub.s32 %v404, %v570
    %v572 = vrot.slane %v543, %v571
    %v573 = vlaneseq
    %v574 = vshrl.u32 %v573, 7
    %v575 = vsub.s32 %v404, %v574
    %v576 = vrot.slane %v546, %v575
    %v577 = vlaneseq
    %v578 = vshrl.u32 %v577, 7
    %v579 = vsub.s32 %v404, %v578
    %v580 = vrot.slane %v549, %v579
    %v581 = vlaneseq
    %v582 = vshrl.u32 %v581, 7
    %v583 = vsub.s32 %v404, %v582
    %v584 = vrot.slane %v552, %v583
    %v585 = vsel %vm437, %v560, %v556
    %v586 = vsel %vm439, %v564, %v585
    %v587 = vsel %vm441, %v568, %v586
    %v588 = vsel %vm443, %v572, %v587
    %v589 = vsel %vm445, %v576, %v588
    %v590 = vsel %vm447, %v580, %v589
    %v591 = vsel %vm449, %v584, %v590
    %v593 = vsel %vm452, %v591, 0.0
    %594 = vadd.xlane.f32.xlu0 %v593
    %v595 = vpop.xlane.xlu0 %594
    %v596 = vrcp.pop %v595
    %v598 = vlaneseq
    %v599 = vshrl.u32 %v598, 7
    %v600 = vsub.s32 0, %v599
    %v601 = vrot.slane %v596, %v600
    %v602 = vlaneseq
    %v603 = vshrl.u32 %v602, 7
    %v604 = vsub.s32 1, %v603
    %v605 = vrot.slane %v596, %v604
    %v606 = vlaneseq
    %v607 = vshrl.u32 %v606, 7
    %v608 = vsub.s32 2, %v607
    %v609 = vrot.slane %v596, %v608
    %v610 = vlaneseq
    %v611 = vshrl.u32 %v610, 7
    %v612 = vsub.s32 3, %v611
    %v613 = vrot.slane %v596, %v612
    %v614 = vlaneseq
    %v615 = vshrl.u32 %v614, 7
    %v616 = vsub.s32 4, %v615
    %v617 = vrot.slane %v596, %v616
    %v618 = vlaneseq
    %v619 = vshrl.u32 %v618, 7
    %v620 = vsub.s32 5, %v619
    %v621 = vrot.slane %v596, %v620
    %v622 = vlaneseq
    %v623 = vshrl.u32 %v622, 7
    %v624 = vsub.s32 6, %v623
    %v625 = vrot.slane %v596, %v624
    %v626 = vlaneseq
    %v627 = vshrl.u32 %v626, 7
    %v628 = vsub.s32 7, %v627
    %v629 = vrot.slane %v596, %v628
    %v638 = vmul.f32 %v506, %v601
    %v639 = vmul.f32 %v508, %v605
    %v640 = vmul.f32 %v510, %v609
    %v641 = vmul.f32 %v512, %v613
    %v642 = vmul.f32 %v514, %v617
    %v643 = vmul.f32 %v516, %v621
    %v644 = vmul.f32 %v518, %v625
    %v645 = vmul.f32 %v520, %v629
    %647 = vset.pattern.permute.xlu0 0
    %648 = vperm.xlu0 %647, %v638
    %v649 = vpop.permute.xlu0 %648
    %652 = vset.pattern.permute.xlu0 0
    %653 = vperm.xlu0 %652, %v639
    %v654 = vpop.permute.xlu0 %653
    %657 = vset.pattern.permute.xlu0 0
    %658 = vperm.xlu0 %657, %v640
    %v659 = vpop.permute.xlu0 %658
    %662 = vset.pattern.permute.xlu0 0
    %663 = vperm.xlu0 %662, %v641
    %v664 = vpop.permute.xlu0 %663
    %667 = vset.pattern.permute.xlu0 0
    %668 = vperm.xlu0 %667, %v642
    %v669 = vpop.permute.xlu0 %668
    %672 = vset.pattern.permute.xlu0 0
    %673 = vperm.xlu0 %672, %v643
    %v674 = vpop.permute.xlu0 %673
    %677 = vset.pattern.permute.xlu0 0
    %678 = vperm.xlu0 %677, %v644
    %v679 = vpop.permute.xlu0 %678
    %682 = vset.pattern.permute.xlu0 0
    %683 = vperm.xlu0 %682, %v645
    %v684 = vpop.permute.xlu0 %683
    %v686 = vmul.f32 %v649, %v89
    %v687 = vmul.f32 %v654, %v90
    %v688 = vmul.f32 %v659, %v91
    %v689 = vmul.f32 %v664, %v92
    %v690 = vmul.f32 %v669, %v93
    %v691 = vmul.f32 %v674, %v94
    %v692 = vmul.f32 %v679, %v95
    %v693 = vmul.f32 %v684, %v96
    %v694 = vrot.slane %v686, 4
    %v695 = vadd.f32 %v686, %v694
    %v696 = vrot.slane %v695, 2
    %v697 = vadd.f32 %v695, %v696
    %v698 = vrot.slane %v697, 1
    %v699 = vadd.f32 %v697, %v698
    %v700 = vrot.slane %v687, 4
    %v701 = vadd.f32 %v687, %v700
    %v702 = vrot.slane %v701, 2
    %v703 = vadd.f32 %v701, %v702
    %v704 = vrot.slane %v703, 1
    %v705 = vadd.f32 %v703, %v704
    %v706 = vrot.slane %v688, 4
    %v707 = vadd.f32 %v688, %v706
    %v708 = vrot.slane %v707, 2
    %v709 = vadd.f32 %v707, %v708
    %v710 = vrot.slane %v709, 1
    %v711 = vadd.f32 %v709, %v710
    %v712 = vrot.slane %v689, 4
    %v713 = vadd.f32 %v689, %v712
    %v714 = vrot.slane %v713, 2
    %v715 = vadd.f32 %v713, %v714
    %v716 = vrot.slane %v715, 1
    %v717 = vadd.f32 %v715, %v716
    %v718 = vrot.slane %v690, 4
    %v719 = vadd.f32 %v690, %v718
    %v720 = vrot.slane %v719, 2
    %v721 = vadd.f32 %v719, %v720
    %v722 = vrot.slane %v721, 1
    %v723 = vadd.f32 %v721, %v722
    %v724 = vrot.slane %v691, 4
    %v725 = vadd.f32 %v691, %v724
    %v726 = vrot.slane %v725, 2
    %v727 = vadd.f32 %v725, %v726
    %v728 = vrot.slane %v727, 1
    %v729 = vadd.f32 %v727, %v728
    %v730 = vrot.slane %v692, 4
    %v731 = vadd.f32 %v692, %v730
    %v732 = vrot.slane %v731, 2
    %v733 = vadd.f32 %v731, %v732
    %v734 = vrot.slane %v733, 1
    %v735 = vadd.f32 %v733, %v734
    %v736 = vrot.slane %v693, 4
    %v737 = vadd.f32 %v693, %v736
    %v738 = vrot.slane %v737, 2
    %v739 = vadd.f32 %v737, %v738
    %v740 = vrot.slane %v739, 1
    %v741 = vadd.f32 %v739, %v740
    %v742 = vld [vmem:[#allocation10] sm:$0xff]
    %v743 = vld [vmem:[#allocation10 + $0x8] sm:$0xff]
    %v744 = vld [vmem:[#allocation10 + $0x10] sm:$0xff]
    %v745 = vld [vmem:[#allocation10 + $0x18] sm:$0xff]
    %v746 = vld [vmem:[#allocation10 + $0x20] sm:$0xff]
    %v747 = vld [vmem:[#allocation10 + $0x28] sm:$0xff]
    %v748 = vld [vmem:[#allocation10 + $0x30] sm:$0xff]
    %v749 = vld [vmem:[#allocation10 + $0x38] sm:$0xff]
    %v750 = vld [vmem:[#allocation10 + $0x40] sm:$0xff]
    %v751 = vld [vmem:[#allocation10 + $0x48] sm:$0xff]
    %v752 = vld [vmem:[#allocation10 + $0x50] sm:$0xff]
    %v753 = vld [vmem:[#allocation10 + $0x58] sm:$0xff]
    %v754 = vld [vmem:[#allocation10 + $0x60] sm:$0xff]
    %v755 = vld [vmem:[#allocation10 + $0x68] sm:$0xff]
    %v756 = vld [vmem:[#allocation10 + $0x70] sm:$0xff]
    %v757 = vld [vmem:[#allocation10 + $0x78] sm:$0xff]
    %v758 = vld [vmem:[#allocation10 + $0x80] sm:$0xff]
    %v759 = vld [vmem:[#allocation10 + $0x88] sm:$0xff]
    %v760 = vld [vmem:[#allocation10 + $0x90] sm:$0xff]
    %v761 = vld [vmem:[#allocation10 + $0x98] sm:$0xff]
    %v762 = vld [vmem:[#allocation10 + $0xa0] sm:$0xff]
    %v763 = vld [vmem:[#allocation10 + $0xa8] sm:$0xff]
    %v764 = vld [vmem:[#allocation10 + $0xb0] sm:$0xff]
    %v765 = vld [vmem:[#allocation10 + $0xb8] sm:$0xff]
    %v766 = vld [vmem:[#allocation10 + $0xc0] sm:$0xff]
    %v767 = vld [vmem:[#allocation10 + $0xc8] sm:$0xff]
    %v768 = vld [vmem:[#allocation10 + $0xd0] sm:$0xff]
    %v769 = vld [vmem:[#allocation10 + $0xd8] sm:$0xff]
    %v770 = vld [vmem:[#allocation10 + $0xe0] sm:$0xff]
    %v771 = vld [vmem:[#allocation10 + $0xe8] sm:$0xff]
    %v772 = vld [vmem:[#allocation10 + $0xf0] sm:$0xff]
    %v773 = vld [vmem:[#allocation10 + $0xf8] sm:$0xff]
    %774 = vmatprep.subr.mxu0 0.0
    %775 = vmatpush1.msra.mxu0 %v758
    %776 = vmatprep.subr.mxu0 0.0
    %777 = vmatpush1.msra.mxu0 %v759
    %778 = vmatprep.subr.mxu0 0.0
    %779 = vmatpush1.msra.mxu0 %v760
    %780 = vmatprep.subr.mxu0 0.0
    %781 = vmatpush1.msra.mxu0 %v761
    %782 = vmatprep.subr.mxu0 0.0
    %783 = vmatpush1.msra.mxu0 %v762
    %784 = vmatprep.subr.mxu0 0.0
    %785 = vmatpush1.msra.mxu0 %v763
    %786 = vmatprep.subr.mxu0 0.0
    %787 = vmatpush1.msra.mxu0 %v764
    %788 = vmatprep.subr.mxu0 0.0
    %789 = vmatpush1.msra.mxu0 %v765
    %790 = vmatprep.subr.mxu0 0.0
    %791 = vmatpush1.msra.mxu0 %v766
    %792 = vmatprep.subr.mxu0 0.0
    %793 = vmatpush1.msra.mxu0 %v767
    %794 = vmatprep.subr.mxu0 0.0
    %795 = vmatpush1.msra.mxu0 %v768
    %796 = vmatprep.subr.mxu0 0.0
    %797 = vmatpush1.msra.mxu0 %v769
    %798 = vmatprep.subr.mxu0 0.0
    %799 = vmatpush1.msra.mxu0 %v770
    %800 = vmatprep.subr.mxu0 0.0
    %801 = vmatpush1.msra.mxu0 %v771
    %802 = vmatprep.subr.mxu0 0.0
    %803 = vmatpush1.msra.mxu0 %v772
    %804 = vmatprep.subr.mxu0 0.0
    %805 = vmatpush1.msra.mxu0 %v773
    %806 = vmatprep.subr.mxu0 0.0
    %807 = vmatpush1.msra.mxu0 0.0
    %808 = vmatprep.subr.mxu0 0.0
    %809 = vmatpush1.msra.mxu0 0.0
    %810 = vmatprep.subr.mxu0 0.0
    %811 = vmatpush1.msra.mxu0 0.0
    %812 = vmatprep.subr.mxu0 0.0
    %813 = vmatpush1.msra.mxu0 0.0
    %814 = vmatprep.subr.mxu0 0.0
    %815 = vmatpush1.msra.mxu0 0.0
    %816 = vmatprep.subr.mxu0 0.0
    %817 = vmatpush1.msra.mxu0 0.0
    %818 = vmatprep.subr.mxu0 0.0
    %819 = vmatpush1.msra.mxu0 0.0
    %820 = vmatprep.subr.mxu0 0.0
    %821 = vmatpush1.msra.mxu0 0.0
    %822 = vmatprep.subr.mxu0 0.0
    %823 = vmatpush1.msra.mxu0 0.0
    %824 = vmatprep.subr.mxu0 0.0
    %825 = vmatpush1.msra.mxu0 0.0
    %826 = vmatprep.subr.mxu0 0.0
    %827 = vmatpush1.msra.mxu0 0.0
    %828 = vmatprep.subr.mxu0 0.0
    %829 = vmatpush1.msra.mxu0 0.0
    %830 = vmatprep.subr.mxu0 0.0
    %831 = vmatpush1.msra.mxu0 0.0
    %832 = vmatprep.subr.mxu0 0.0
    %833 = vmatpush1.msra.mxu0 0.0
    %834 = vmatprep.subr.mxu0 0.0
    %835 = vmatpush1.msra.mxu0 0.0
    %836 = vmatprep.subr.mxu0 0.0
    %837 = vmatpush1.msra.mxu0 0.0
    %838 = vmatprep.mubr.f32.mxu0 0.0
    %839 = vmatmul.mubr.f32.gmra.mrb[0].mxu0 %v88
    %v840 = vpop.f32.mrb[0].mxu0
    %v841 = vadd.f32 0.0, %v840
    %v842 = vpop.f32.mrb[0].mxu0
    %843 = vdwg.mxu0
    %v852 = vsel %vm437, %v705, %v699
    %v853 = vsel %vm439, %v711, %v852
    %v854 = vsel %vm441, %v717, %v853
    %v855 = vsel %vm443, %v723, %v854
    %v856 = vsel %vm445, %v729, %v855
    %v857 = vsel %vm447, %v735, %v856
    %v858 = vsel %vm449, %v741, %v857
    %860 = vmatprep.subr.mxu0 0.0
    %861 = vmatpush1.msra.mxu0 %v742
    %862 = vmatprep.subr.mxu0 0.0
    %863 = vmatpush1.msra.mxu0 %v743
    %864 = vmatprep.subr.mxu0 0.0
    %865 = vmatpush1.msra.mxu0 %v744
    %866 = vmatprep.subr.mxu0 0.0
    %867 = vmatpush1.msra.mxu0 %v745
    %868 = vmatprep.subr.mxu0 0.0
    %869 = vmatpush1.msra.mxu0 %v746
    %870 = vmatprep.subr.mxu0 0.0
    %871 = vmatpush1.msra.mxu0 %v747
    %872 = vmatprep.subr.mxu0 0.0
    %873 = vmatpush1.msra.mxu0 %v748
    %874 = vmatprep.subr.mxu0 0.0
    %875 = vmatpush1.msra.mxu0 %v749
    %876 = vmatprep.subr.mxu0 0.0
    %877 = vmatpush1.msra.mxu0 %v750
    %878 = vmatprep.subr.mxu0 0.0
    %879 = vmatpush1.msra.mxu0 %v751
    %880 = vmatprep.subr.mxu0 0.0
    %881 = vmatpush1.msra.mxu0 %v752
    %882 = vmatprep.subr.mxu0 0.0
    %883 = vmatpush1.msra.mxu0 %v753
    %884 = vmatprep.subr.mxu0 0.0
    %885 = vmatpush1.msra.mxu0 %v754
    %886 = vmatprep.subr.mxu0 0.0
    %887 = vmatpush1.msra.mxu0 %v755
    %888 = vmatprep.subr.mxu0 0.0
    %889 = vmatpush1.msra.mxu0 %v756
    %890 = vmatprep.subr.mxu0 0.0
    %891 = vmatpush1.msra.mxu0 %v757
    %892 = vmatprep.subr.mxu0 0.0
    %893 = vmatpush1.msra.mxu0 0.0
    %894 = vmatprep.subr.mxu0 0.0
    %895 = vmatpush1.msra.mxu0 0.0
    %896 = vmatprep.subr.mxu0 0.0
    %897 = vmatpush1.msra.mxu0 0.0
    %898 = vmatprep.subr.mxu0 0.0
    %899 = vmatpush1.msra.mxu0 0.0
    %900 = vmatprep.subr.mxu0 0.0
    %901 = vmatpush1.msra.mxu0 0.0
    %902 = vmatprep.subr.mxu0 0.0
    %903 = vmatpush1.msra.mxu0 0.0
    %904 = vmatprep.subr.mxu0 0.0
    %905 = vmatpush1.msra.mxu0 0.0
    %906 = vmatprep.subr.mxu0 0.0
    %907 = vmatpush1.msra.mxu0 0.0
    %908 = vmatprep.subr.mxu0 0.0
    %909 = vmatpush1.msra.mxu0 0.0
    %910 = vmatprep.subr.mxu0 0.0
    %911 = vmatpush1.msra.mxu0 0.0
    %912 = vmatprep.subr.mxu0 0.0
    %913 = vmatpush1.msra.mxu0 0.0
    %914 = vmatprep.subr.mxu0 0.0
    %915 = vmatpush1.msra.mxu0 0.0
    %916 = vmatprep.subr.mxu0 0.0
    %917 = vmatpush1.msra.mxu0 0.0
    %918 = vmatprep.subr.mxu0 0.0
    %919 = vmatpush1.msra.mxu0 0.0
    %920 = vmatprep.subr.mxu0 0.0
    %921 = vmatpush1.msra.mxu0 0.0
    %922 = vmatprep.subr.mxu0 0.0
    %923 = vmatpush1.msra.mxu0 0.0
    %924 = vmatprep.mubr.f32.mxu0 0.0
    %925 = vmatmul.mubr.f32.gmra.mrb[0].mxu0 %v858
    %v926 = vpop.f32.mrb[0].mxu0
    %v927 = vadd.f32 %v841, %v926
    %v928 = vpop.f32.mrb[0].mxu0
    %929 = vdwg.mxu0
    %v930 = vtanh.pop %v927
    %931 = vst [vmem:[#allocation11] sm:$0xff] %v930
    %932 = vst [vmem:[#allocation12] sm:$0xff] 0.0
    %v933 = vlaneseq
    %v934 = vshrl.u32 %v933, 7
    %v935 = vsub.s32 %v404, %v934
    %v936 = vrot.slane %v649, %v935
    %v937 = vlaneseq
    %v938 = vshrl.u32 %v937, 7
    %v939 = vsub.s32 %v404, %v938
    %v940 = vrot.slane %v654, %v939
    %v941 = vlaneseq
    %v942 = vshrl.u32 %v941, 7
    %v943 = vsub.s32 %v404, %v942
    %v944 = vrot.slane %v659, %v943
    %v945 = vlaneseq
    %v946 = vshrl.u32 %v945, 7
    %v947 = vsub.s32 %v404, %v946
    %v948 = vrot.slane %v664, %v947
    %v949 = vlaneseq
    %v950 = vshrl.u32 %v949, 7
    %v951 = vsub.s32 %v404, %v950
    %v952 = vrot.slane %v669, %v951
    %v953 = vlaneseq
    %v954 = vshrl.u32 %v953, 7
    %v955 = vsub.s32 %v404, %v954
    %v956 = vrot.slane %v674, %v955
    %v957 = vlaneseq
    %v958 = vshrl.u32 %v957, 7
    %v959 = vsub.s32 %v404, %v958
    %v960 = vrot.slane %v679, %v959
    %v961 = vlaneseq
    %v962 = vshrl.u32 %v961, 7
    %v963 = vsub.s32 %v404, %v962
    %v964 = vrot.slane %v684, %v963
    %v965 = vsel %vm437, %v940, %v936
    %v966 = vsel %vm439, %v944, %v965
    %v967 = vsel %vm441, %v948, %v966
    %v968 = vsel %vm443, %v952, %v967
    %v969 = vsel %vm445, %v956, %v968
    %v970 = vsel %vm447, %v960, %v969
    %v971 = vsel %vm449, %v964, %v970
    %973 = vst.msk [vmem:[#allocation12] sm:$0xff] %vm452, %v971
    // Predicated region
    $region42: #{tpu_custom_call.1} parent=1 // pred_check
      _
    $region43: #{tpu_custom_call.1} parent=1 // pred_check_branch
      %975 = sbr.rel (0) target = $region45
    $region44: #{tpu_custom_call.1} parent=1 // pred_region
      %s977 = ssub.s32 128, 128
      %978 = vsyncadd [#allocation4], %s977
      %s980 = sshll.u32 [#allocation11], 4
      %s981 = int_to_ptr.vmem [resolvable:$true] %s980
      %983 = dma.vmem_to_hbm [thread:$0]  %s981, 128, %s5, [#allocation4]
    $region45: #{tpu_custom_call.1} parent=1 // pred_fallthru
      _
    // Predicated region
    $region46: #{tpu_custom_call.1} parent=1 // pred_check
      _
    $region47: #{tpu_custom_call.1} parent=1 // pred_check_branch
      %985 = sbr.rel (0) target = $region49
    $region48: #{tpu_custom_call.1} parent=1 // pred_region
      %s987 = ssub.s32 128, 128
      %988 = vsyncadd [#allocation13], %s987
      %s990 = sshll.u32 [#allocation12], 4
      %s991 = int_to_ptr.vmem [resolvable:$true] %s990
      %993 = dma.vmem_to_hbm [thread:$0]  %s991, 128, %s6, [#allocation13]
    $region49: #{tpu_custom_call.1} parent=1 // pred_fallthru
      _
    // Predicated region
    $region50: #{tpu_custom_call.1} parent=1 // pred_check
      _
    $region51: #{tpu_custom_call.1} parent=1 // pred_check_branch
      %995 = sbr.rel (0) target = $region53
    $region52: #{tpu_custom_call.1} parent=1 // pred_region
      %996 = dma.done [#allocation4], 128
    $region53: #{tpu_custom_call.1} parent=1 // pred_fallthru
      _
    // Predicated region
    $region54: #{tpu_custom_call.1} parent=1 // pred_check
      _
    $region55: #{tpu_custom_call.1} parent=1 // pred_check_branch
      %998 = sbr.rel (0) target = $region57
    $region56: #{tpu_custom_call.1} parent=1 // pred_region
      %999 = dma.done [#allocation13], 128
    $region57: #{tpu_custom_call.1} parent=1 // pred_fallthru
      _
    %1000 = vsyncpa [#allocation3], 1
    %1001 = vsyncpa [#allocation6], 1
    %1002 = vsyncpa [#allocation9], 1
    %1003 = vsyncpa [#allocation4], 1
    %1004 = vsyncpa [#allocation13], 1

</llo_original>
